<compile_context>
chip_gen: v6e
topology: v6e:2x2x1
jax: 0.10.0
libtpu: 0.0.40
codegen_flags: <defaults>
</compile_context>

<pallas_src>
import functools
import math

import numpy as np
import jax
import jax.numpy as jnp
from jax.experimental import pallas as pl
from jax.experimental.pallas import tpu as pltpu


def _dft_mats_np(n):
    """Real/imag parts of the orthonormal DFT matrix of size n (symmetric)."""
    k = np.arange(n)
    ang = 2.0 * np.pi * np.outer(k, k) / n
    c = (np.cos(ang) / np.sqrt(n)).astype(np.float32)
    s = (np.sin(ang) / np.sqrt(n)).astype(np.float32)
    return c, s


def _mxu_target_dims():
    """(row_target, lane_target): 256 on v6e/v7x (256-wide MXU), else 128."""
    try:
        kind = jax.devices()[0].device_kind.lower()
    except Exception:
        return 128, 128
    if "v6" in kind or "v7" in kind:
        return 256, 256
    return 128, 128


def _pick_tiles(m_images, ph, pw, row_target, lane_target):
    """Choose (tm_r, tm_c, G): images per block along sublane/lane axes + grid."""
    # Lane axis: smallest tm_c with tm_c*pw a multiple of 128 (lane-dense vregs,
    # unmasked stores); optionally grow toward `lane_target` while there are
    # enough images to fill the extra lane slots.  Never a grid-overhead fix:
    # block-diagonal W-pass MACs scale linearly with tm_c.
    if pw >= 128:
        tm_c = 1
    else:
        tm_c = 128 // math.gcd(pw, 128)
        if tm_c * pw > 512:          # odd patch widths: stay simple/correct
            tm_c = 1
    while tm_c * pw < lane_target and tm_c * 2 * pw <= 512 and m_images > tm_c:
        tm_c *= 2

    # Sublane axis: tm_r*ph must be a multiple of 8; target ~row_target rows so
    # the H-pass matmul K dimension fills the MXU, but no larger (block-diag
    # H-pass MACs scale linearly with tm_r).
    step = 8 // math.gcd(ph, 8)
    tgt = max(1, row_target // ph)
    tm_r = max(step, (tgt // step) * step)
    m_rows = -(-m_images // tm_c)                       # image rows needed
    tm_r = min(tm_r, ((m_rows + step - 1) // step) * step)
    tm_r = max(tm_r, step)

    G = -(-m_images // (tm_r * tm_c))
    # Prefer G >= 2 so the "parallel" grid axis can shard across v7x's two
    # TensorCores (no effect on single-core v5e/v6e).
    if G == 1:
        half = ((-(-m_rows // 2)) + step - 1) // step * step
        if 0 < half < tm_r:
            tm_r = half
            G = -(-m_images // (tm_r * tm_c))
    return tm_r, tm_c, G


def _ffl_kernel(p_ref, t_ref, chbd_ref, shbd_ref, csbd_ref, cwbd_ref, swbd_ref,
                out_ref, *, alpha, log_matrix, tm_r, tm_c, ph, pw):
    R = tm_r * ph
    L = tm_c * pw

    # d = pred - target for the tm_r x tm_c grid of images in this block.
    # FFT linearity: F(pred) - F(target) = F(pred - target)  (exact).
    d = p_ref[...].astype(jnp.float32) - t_ref[...].astype(jnp.float32)  # (R, L)

    # W-pass: right-multiply by block-diagonal C_W / S_W (per lane image block).
    u = jnp.dot(d, cwbd_ref[...], preferred_element_type=jnp.float32)    # d C_W
    v = jnp.dot(d, swbd_ref[...], preferred_element_type=jnp.float32)    # d S_W

    # H-pass: (C_H - i S_H)(u - i v) via the 3-multiplication complex product.
    m1 = jnp.dot(chbd_ref[...], u, preferred_element_type=jnp.float32)       # C u
    m2 = jnp.dot(shbd_ref[...], v, preferred_element_type=jnp.float32)       # S v
    m3 = jnp.dot(csbd_ref[...], u + v, preferred_element_type=jnp.float32)   # (C+S)(u+v)
    re = m1 - m2
    im = m1 + m2 - m3                                   # = -(S u + C v)

    fd = re * re + im * im                              # |F(pred) - F(target)|^2

    # Spectrum weight matrix.
    if alpha == 1.0:
        w = jnp.sqrt(fd)
    elif alpha == 2.0:
        w = fd
    else:
        w = jnp.power(fd, jnp.float32(0.5 * alpha))
    if log_matrix:
        w = jnp.log(w + 1.0)

    # Per-image max: sublane reduce within each ph row block (lane-dense), then
    # a tiny per-pw lane-block max.  Guarded reciprocal on the small (tm_r, L)
    # array only — all-zero / padded images get weight 0 (no NaN path).
    rm = jnp.max(w.reshape(tm_r, ph, L), axis=1)                        # (tm_r, L)
    bm = jnp.max(rm.reshape(tm_r, tm_c, pw), axis=2, keepdims=True)     # (tm_r, tm_c, 1)
    bm = jnp.broadcast_to(bm, (tm_r, tm_c, pw)).reshape(tm_r, L)
    inv = jnp.where(bm > 0.0, 1.0 / bm, jnp.float32(0.0))               # (tm_r, L)
    inv = jnp.broadcast_to(inv.reshape(tm_r, 1, L), (tm_r, ph, L)).reshape(R, L)

    wn = jnp.clip(w * inv, 0.0, 1.0)

    # Per-lane partial sums (sublane-only reduce), folded to a lane-dense
    # (1, 128) output block; the cross-block sum finishes in the wrapper.
    col = jnp.sum(wn * fd, axis=0, keepdims=True)                       # (1, L)
    if L % 128 == 0:
        col = jnp.sum(col.reshape(L // 128, 128), axis=0, keepdims=True)
    else:
        # Rare path (pw >= 128 and not a multiple of 128): exact because /128
        # and the wrapper's sum of 128 equal values are power-of-two exact.
        col = jnp.broadcast_to(jnp.sum(col) * jnp.float32(1.0 / 128.0), (1, 128))
    out_ref[...] = col


def focal_frequency_loss(pred, target, *, loss_weight=1.0, alpha=1.0,
                         patch_factor=1, ave_spectrum=False, log_matrix=False,
                         batch_matrix=False):
    # TODO(synk): batch_matrix=True (batch-global max normalization) and an
    # externally supplied precomputed `matrix` are not implemented in-kernel.
    assert not batch_matrix, "batch_matrix=True not supported"

    N, C, H, W = pred.shape
    pf = patch_factor
    assert H % pf == 0 and W % pf == 0
    ph, pw = H // pf, W // pf

    if pf == 1:
        p = pred.reshape(N, 1, C, ph, pw)
        t = target.reshape(N, 1, C, ph, pw)
    else:
        def to_patches(x):
            # (N,C,H,W) -> (N, pf*pf, C, ph, pw); patch index i*pf + j as in torch.
            x = x.reshape(N, C, pf, ph, pf, pw).transpose(0, 2, 4, 1, 3, 5)
            return x.reshape(N, pf * pf, C, ph, pw)
        p, t = to_patches(pred), to_patches(target)

    if ave_spectrum:
        # FFT linearity: batch-mean of spectra == spectrum of the batch-mean.
        p = jnp.mean(p, axis=0, keepdims=True)
        t = jnp.mean(t, axis=0, keepdims=True)

    M = p.shape[0] * pf * pf * C                   # number of (n, patch, c) images
    row_target, lane_target = _mxu_target_dims()
    tm_r, tm_c, G = _pick_tiles(M, ph, pw, row_target, lane_target)
    R, L = tm_r * ph, tm_c * pw
    per_block = tm_r * tm_c

    def to_tiles(x):
        x = x.reshape(M, ph, pw)
        pad = G * per_block - M
        if pad:
            # Zero-padded images contribute exactly 0 (their max is 0 -> weight 0).
            x = jnp.pad(x, ((0, pad), (0, 0), (0, 0)))
        # Layout plumbing: present each block as a lane-dense (tm_r*ph, tm_c*pw)
        # slab of tm_r x tm_c images.  Trivial (no real copy) when tm_c == 1.
        x = x.reshape(G, tm_r, tm_c, ph, pw).transpose(0, 1, 3, 2, 4)
        return x.reshape(G * R, L)

    p2, t2 = to_tiles(p), to_tiles(t)              # original dtype; cast in-kernel

    # DFT constants (f32, block-diagonal over the stacked images).
    ch, sh = _dft_mats_np(ph)
    cw, sw = _dft_mats_np(pw)
    eye_r = np.eye(tm_r, dtype=np.float32)
    eye_c = np.eye(tm_c, dtype=np.float32)
    chbd = jnp.asarray(np.kron(eye_r, ch))          # (R, R)
    shbd = jnp.asarray(np.kron(eye_r, sh))          # (R, R)
    csbd = jnp.asarray(np.kron(eye_r, ch + sh))     # (R, R)  Karatsuba term
    cwbd = jnp.asarray(np.kron(eye_c, cw))          # (L, L)
    swbd = jnp.asarray(np.kron(eye_c, sw))          # (L, L)

    kernel = functools.partial(_ffl_kernel, alpha=float(alpha),
                               log_matrix=bool(log_matrix),
                               tm_r=tm_r, tm_c=tm_c, ph=ph, pw=pw)

    # Rough VMEM budget (double-buffered inputs, constants, live intermediates);
    # keep headroom but stay under v7x's 64 MiB physical VMEM.
    est = 4 * (4 * R * L + 3 * R * R + 2 * L * L + 12 * R * L)
    vmem_limit = int(min(64 * 1024 * 1024, max(32 * 1024 * 1024, 2 * est)))

    partials = pl.pallas_call(
        kernel,
        out_shape=jax.ShapeDtypeStruct((1, G * 128), jnp.float32),
        grid=(G,),
        in_specs=[
            pl.BlockSpec((R, L), lambda g: (g, 0)),
            pl.BlockSpec((R, L), lambda g: (g, 0)),
            pl.BlockSpec((R, R), lambda g: (0, 0)),
            pl.BlockSpec((R, R), lambda g: (0, 0)),
            pl.BlockSpec((R, R), lambda g: (0, 0)),
            pl.BlockSpec((L, L), lambda g: (0, 0)),
            pl.BlockSpec((L, L), lambda g: (0, 0)),
        ],
        out_specs=pl.BlockSpec((1, 128), lambda g: (0, g)),
        compiler_params=pltpu.CompilerParams(
            dimension_semantics=("parallel",),
            vmem_limit_bytes=vmem_limit),
    )(p2, t2, chbd, shbd, csbd, cwbd, swbd)

    total = jnp.sum(partials)
    count = M * ph * pw
    return total / jnp.float32(count) * jnp.float32(loss_weight)


def _reference_loss(pred, target, *, loss_weight=1.0, alpha=1.0,
                    patch_factor=1, ave_spectrum=False, log_matrix=False):
    """Pure-JAX reference mirroring the PyTorch module (default flags)."""
    N, C, H, W = pred.shape
    pf = patch_factor
    ph, pw = H // pf, W // pf

    def tensor2freq(x):
        x = x.reshape(N, C, pf, ph, pf, pw).transpose(0, 2, 4, 1, 3, 5)
        y = x.reshape(N, pf * pf, C, ph, pw)
        f = jnp.fft.fft2(y, norm="ortho")
        return jnp.stack([f.real, f.imag], axis=-1)

    pf_ = tensor2freq(pred.astype(jnp.float32))
    tf_ = tensor2freq(target.astype(jnp.float32))
    if ave_spectrum:
        pf_ = jnp.mean(pf_, axis=0, keepdims=True)
        tf_ = jnp.mean(tf_, axis=0, keepdims=True)

    d = (pf_ - tf_) ** 2
    freq_dist = d[..., 0] + d[..., 1]
    w = jnp.sqrt(freq_dist) ** alpha
    if log_matrix:
        w = jnp.log(w + 1.0)
    w = w / jnp.max(w, axis=(-2, -1), keepdims=True)
    w = jnp.where(jnp.isnan(w), 0.0, w)
    w = jnp.clip(w, 0.0, 1.0)
    return jnp.mean(w * freq_dist) * loss_weight


if __name__ == "__main__":
    key = jax.random.PRNGKey(0)
    k1, k2 = jax.random.split(key)
    N, C, H, W = 2, 4, 16, 16
    pred = jax.random.normal(k1, (N, C, H, W), dtype=jnp.float32)
    target = jax.random.normal(k2, (N, C, H, W), dtype=jnp.float32)

    loss = focal_frequency_loss(pred, target, loss_weight=1.0, alpha=1.0,
                                patch_factor=1, ave_spectrum=False,
                                log_matrix=False, batch_matrix=False)
    loss = jax.block_until_ready(loss)

    ref = jax.block_until_ready(_reference_loss(pred, target))
    np.testing.assert_allclose(np.asarray(loss), np.asarray(ref),
                               rtol=1e-4, atol=1e-4)
    print("KERNEL_OK")
</pallas_src>

<mosaic_0001>
module attributes {stable_mosaic.version = 11 : i64} {
  func.func @_ffl_kernel(%arg0: i32, %arg1: memref<16x128xf32, #tpu.memory_space<vmem>>, %arg2: memref<16x128xf32, #tpu.memory_space<vmem>>, %arg3: memref<16x16xf32, #tpu.memory_space<vmem>>, %arg4: memref<16x16xf32, #tpu.memory_space<vmem>>, %arg5: memref<16x16xf32, #tpu.memory_space<vmem>>, %arg6: memref<128x128xf32, #tpu.memory_space<vmem>>, %arg7: memref<128x128xf32, #tpu.memory_space<vmem>>, %arg8: memref<1x128xf32, #tpu.memory_space<vmem>>) attributes {dimension_semantics = [#tpu.dimension_semantics<parallel>], iteration_bounds = array<i64: 1>, scalar_prefetch = 0 : i64, scratch_operands = 0 : i64, tpu.core_type = #tpu.core_type<tc>, window_params = [{transform_indices = @transform_0, window_bounds = array<i64: 16, 128>}, {transform_indices = @transform_1, window_bounds = array<i64: 16, 128>}, {pipeline_mode = #tpu.pipeline_mode<synchronous>, transform_indices = @transform_2, window_bounds = array<i64: 16, 16>}, {pipeline_mode = #tpu.pipeline_mode<synchronous>, transform_indices = @transform_3, window_bounds = array<i64: 16, 16>}, {pipeline_mode = #tpu.pipeline_mode<synchronous>, transform_indices = @transform_4, window_bounds = array<i64: 16, 16>}, {pipeline_mode = #tpu.pipeline_mode<synchronous>, transform_indices = @transform_5, window_bounds = array<i64: 128, 128>}, {pipeline_mode = #tpu.pipeline_mode<synchronous>, transform_indices = @transform_6, window_bounds = array<i64: 128, 128>}, {transform_indices = @transform_7, window_bounds = array<i64: 1, 128>}]} {
    %c0 = arith.constant 0 : index
    %c0_0 = arith.constant 0 : index
    %0 = vector.load %arg1[%c0, %c0_0] : memref<16x128xf32, #tpu.memory_space<vmem>>, vector<16x128xf32>
    %c0_1 = arith.constant 0 : index
    %c0_2 = arith.constant 0 : index
    %1 = vector.load %arg2[%c0_1, %c0_2] : memref<16x128xf32, #tpu.memory_space<vmem>>, vector<16x128xf32>
    %2 = arith.subf %0, %1 : vector<16x128xf32>
    %c0_3 = arith.constant 0 : index
    %c0_4 = arith.constant 0 : index
    %3 = vector.load %arg6[%c0_3, %c0_4] : memref<128x128xf32, #tpu.memory_space<vmem>>, vector<128x128xf32>
    %cst = arith.constant dense<0.000000e+00> : vector<16x128xf32>
    %4 = tpu.matmul %2, %3, %cst {dimension_numbers = #tpu.dot_dimension_numbers<[1], [0], [0], [1], [0, 0, 1, 1], [], []>} : vector<16x128xf32>, vector<128x128xf32>, vector<16x128xf32> -> vector<16x128xf32>
    %c0_5 = arith.constant 0 : index
    %c0_6 = arith.constant 0 : index
    %5 = vector.load %arg7[%c0_5, %c0_6] : memref<128x128xf32, #tpu.memory_space<vmem>>, vector<128x128xf32>
    %cst_7 = arith.constant dense<0.000000e+00> : vector<16x128xf32>
    %6 = tpu.matmul %2, %5, %cst_7 {dimension_numbers = #tpu.dot_dimension_numbers<[1], [0], [0], [1], [0, 0, 1, 1], [], []>} : vector<16x128xf32>, vector<128x128xf32>, vector<16x128xf32> -> vector<16x128xf32>
    %c0_8 = arith.constant 0 : index
    %c0_9 = arith.constant 0 : index
    %7 = vector.load %arg3[%c0_8, %c0_9] : memref<16x16xf32, #tpu.memory_space<vmem>>, vector<16x16xf32>
    %cst_10 = arith.constant dense<0.000000e+00> : vector<16x128xf32>
    %8 = tpu.matmul %7, %4, %cst_10 {dimension_numbers = #tpu.dot_dimension_numbers<[1], [0], [0], [1], [0, 0, 1, 1], [], []>} : vector<16x16xf32>, vector<16x128xf32>, vector<16x128xf32> -> vector<16x128xf32>
    %c0_11 = arith.constant 0 : index
    %c0_12 = arith.constant 0 : index
    %9 = vector.load %arg4[%c0_11, %c0_12] : memref<16x16xf32, #tpu.memory_space<vmem>>, vector<16x16xf32>
    %cst_13 = arith.constant dense<0.000000e+00> : vector<16x128xf32>
    %10 = tpu.matmul %9, %6, %cst_13 {dimension_numbers = #tpu.dot_dimension_numbers<[1], [0], [0], [1], [0, 0, 1, 1], [], []>} : vector<16x16xf32>, vector<16x128xf32>, vector<16x128xf32> -> vector<16x128xf32>
    %c0_14 = arith.constant 0 : index
    %c0_15 = arith.constant 0 : index
    %11 = vector.load %arg5[%c0_14, %c0_15] : memref<16x16xf32, #tpu.memory_space<vmem>>, vector<16x16xf32>
    %12 = arith.addf %4, %6 : vector<16x128xf32>
    %cst_16 = arith.constant dense<0.000000e+00> : vector<16x128xf32>
    %13 = tpu.matmul %11, %12, %cst_16 {dimension_numbers = #tpu.dot_dimension_numbers<[1], [0], [0], [1], [0, 0, 1, 1], [], []>} : vector<16x16xf32>, vector<16x128xf32>, vector<16x128xf32> -> vector<16x128xf32>
    %14 = arith.subf %8, %10 : vector<16x128xf32>
    %15 = arith.addf %8, %10 : vector<16x128xf32>
    %16 = arith.subf %15, %13 : vector<16x128xf32>
    %17 = arith.mulf %14, %14 : vector<16x128xf32>
    %18 = arith.mulf %16, %16 : vector<16x128xf32>
    %19 = arith.addf %17, %18 : vector<16x128xf32>
    %20 = math.sqrt %19 : vector<16x128xf32>
    %21 = vector.shape_cast %20 : vector<16x128xf32> to vector<1x16x128xf32>
    %cst_17 = arith.constant dense<0xFF800000> : vector<1x128xf32>
    %22 = vector.multi_reduction <maximumf>, %21, %cst_17 [1] : vector<1x16x128xf32> to vector<1x128xf32>
    %23 = vector.shape_cast %22 : vector<1x128xf32> to vector<1x8x16xf32>
    %cst_18 = arith.constant dense<0xFF800000> : vector<1x8xf32>
    %24 = vector.multi_reduction <maximumf>, %23, %cst_18 [2] : vector<1x8x16xf32> to vector<1x8xf32>
    %25 = vector.shape_cast %24 : vector<1x8xf32> to vector<1x8x1xf32>
    %26 = vector.shape_cast %25 : vector<1x8x1xf32> to vector<1x8x1xf32>
    %27 = vector.broadcast %26 : vector<1x8x1xf32> to vector<1x8x16xf32>
    %28 = vector.shape_cast %27 : vector<1x8x16xf32> to vector<1x128xf32>
    %cst_19 = arith.constant 0.000000e+00 : f32
    %29 = vector.broadcast %cst_19 : f32 to vector<1x128xf32>
    %30 = arith.cmpf ogt, %28, %29 : vector<1x128xf32>
    %cst_20 = arith.constant 1.000000e+00 : f32
    %31 = vector.broadcast %cst_20 : f32 to vector<1x128xf32>
    %32 = arith.divf %31, %28 : vector<1x128xf32>
    %cst_21 = arith.constant 0.000000e+00 : f32
    %33 = vector.broadcast %cst_21 : f32 to vector<1x128xf32>
    %34 = arith.select %30, %32, %33 : vector<1x128xi1>, vector<1x128xf32>
    %35 = vector.shape_cast %34 : vector<1x128xf32> to vector<1x1x128xf32>
    %36 = vector.shape_cast %35 : vector<1x1x128xf32> to vector<1x1x128xf32>
    %37 = vector.broadcast %36 : vector<1x1x128xf32> to vector<1x16x128xf32>
    %38 = vector.shape_cast %37 : vector<1x16x128xf32> to vector<16x128xf32>
    %39 = arith.mulf %20, %38 : vector<16x128xf32>
    %cst_22 = arith.constant 0.000000e+00 : f32
    %cst_23 = arith.constant 1.000000e+00 : f32
    %40 = vector.broadcast %cst_22 : f32 to vector<16x128xf32>
    %41 = arith.maximumf %40, %39 : vector<16x128xf32>
    %42 = vector.broadcast %cst_23 : f32 to vector<16x128xf32>
    %43 = arith.minimumf %42, %41 : vector<16x128xf32>
    %44 = arith.mulf %43, %19 : vector<16x128xf32>
    %cst_24 = arith.constant dense<0.000000e+00> : vector<128xf32>
    %45 = vector.multi_reduction <add>, %44, %cst_24 [0] : vector<16x128xf32> to vector<128xf32>
    %46 = vector.shape_cast %45 : vector<128xf32> to vector<1x128xf32>
    %cst_25 = arith.constant dense<0.000000e+00> : vector<128xf32>
    %47 = vector.multi_reduction <add>, %46, %cst_25 [0] : vector<1x128xf32> to vector<128xf32>
    %48 = vector.shape_cast %47 : vector<128xf32> to vector<1x128xf32>
    %c0_26 = arith.constant 0 : index
    %c0_27 = arith.constant 0 : index
    %49 = vector.load %arg8[%c0_26, %c0_27] : memref<1x128xf32, #tpu.memory_space<vmem>>, vector<1x128xf32>
    tpu.vector_store %arg8[%c0_26, %c0_27], %48 {strides = array<i32>} : memref<1x128xf32, #tpu.memory_space<vmem>>, vector<1x128xf32>,
    return
  }
  func.func @transform_0(%arg0: i32) -> (i32, i32) {
    %c0_i32 = arith.constant 0 : i32
    %c0_i32_0 = arith.constant 0 : i32
    return %arg0, %c0_i32 : i32, i32
  }
  func.func @transform_1(%arg0: i32) -> (i32, i32) {
    %c0_i32 = arith.constant 0 : i32
    %c0_i32_0 = arith.constant 0 : i32
    return %arg0, %c0_i32 : i32, i32
  }
  func.func @transform_2(%arg0: i32) -> (i32, i32) {
    %c0_i32 = arith.constant 0 : i32
    %c0_i32_0 = arith.constant 0 : i32
    %c0_i32_1 = arith.constant 0 : i32
    return %c0_i32, %c0_i32_0 : i32, i32
  }
  func.func @transform_3(%arg0: i32) -> (i32, i32) {
    %c0_i32 = arith.constant 0 : i32
    %c0_i32_0 = arith.constant 0 : i32
    %c0_i32_1 = arith.constant 0 : i32
    return %c0_i32, %c0_i32_0 : i32, i32
  }
  func.func @transform_4(%arg0: i32) -> (i32, i32) {
    %c0_i32 = arith.constant 0 : i32
    %c0_i32_0 = arith.constant 0 : i32
    %c0_i32_1 = arith.constant 0 : i32
    return %c0_i32, %c0_i32_0 : i32, i32
  }
  func.func @transform_5(%arg0: i32) -> (i32, i32) {
    %c0_i32 = arith.constant 0 : i32
    %c0_i32_0 = arith.constant 0 : i32
    %c0_i32_1 = arith.constant 0 : i32
    return %c0_i32, %c0_i32_0 : i32, i32
  }
  func.func @transform_6(%arg0: i32) -> (i32, i32) {
    %c0_i32 = arith.constant 0 : i32
    %c0_i32_0 = arith.constant 0 : i32
    %c0_i32_1 = arith.constant 0 : i32
    return %c0_i32, %c0_i32_0 : i32, i32
  }
  func.func @transform_7(%arg0: i32) -> (i32, i32) {
    %c0_i32 = arith.constant 0 : i32
    %c0_i32_0 = arith.constant 0 : i32
    return %c0_i32, %arg0 : i32, i32
  }
}

</mosaic_0001>

<llo_original>
// kernel: tpu_custom_call.1
$region0: #{tpu_custom_call.1}
  #allocation0 [shape = 'u32[]', space=smem, size = 0x4, offset = 0x4, fixed_abs, tag = 'smem constant byte address 0x4 - core index']
  #allocation1 [shape = 'u32[144,128]{1,0:T(1,128)}', space=vmem, size = 0x12000, scoped, tag = 'internal scratch']
  %s0 = inlined_call_operand.hbm [shape: f32[16,128], index: 0, kind: input, shape index: {}]
  %s1 = inlined_call_operand.hbm [shape: f32[16,128], index: 1, kind: input, shape index: {}]
  %s2 = inlined_call_operand.hbm [shape: f32[16,16], index: 2, kind: input, shape index: {}]
  %s3 = inlined_call_operand.hbm [shape: f32[16,16], index: 3, kind: input, shape index: {}]
  %s4 = inlined_call_operand.hbm [shape: f32[16,16], index: 4, kind: input, shape index: {}]
  %s5 = inlined_call_operand.hbm [shape: f32[128,128], index: 5, kind: input, shape index: {}]
  %s6 = inlined_call_operand.hbm [shape: f32[128,128], index: 6, kind: input, shape index: {}]
  %s7 = inlined_call_operand.hbm [shape: f32[1,128], index: 7, kind: output, shape index: {}]
  %s8 = sld [smem:[#allocation0]]
  $region66: #{tpu_custom_call.1} parent=0
    _
  %s10 = ssub.s32 1, %s8
  %s11 = scalar_select 0, %s10, %s8
  $region1: #{tpu_custom_call.1} parent=0
    #allocation2 [shape = 'u8[8192]{0}', space=vmem, size = 0x2000, scoped, tag = 'input window, operand 0, single buffered']
    #allocation3 [shape = 's32[1]{0}', space=sflag, size = 0x4, scoped, tag = 'scoped memory for tpu_custom_call.1']
    #allocation4 [shape = 's32[1]{0}', space=sflag, size = 0x4, scoped, tag = 'scoped memory for tpu_custom_call.1']
    #allocation5 [shape = 'u8[8192]{0}', space=vmem, size = 0x2000, scoped, tag = 'input window, operand 1, single buffered']
    #allocation6 [shape = 's32[1]{0}', space=sflag, size = 0x4, scoped, tag = 'scoped memory for tpu_custom_call.1']
    #allocation7 [shape = 'u8[8192]{0}', space=vmem, size = 0x2000, scoped, tag = 'input window, operand 2, single buffered']
    #allocation8 [shape = 'u8[8192]{0}', space=vmem, size = 0x2000, scoped, tag = 'input window, operand 3, single buffered']
    #allocation9 [shape = 's32[1]{0}', space=sflag, size = 0x4, scoped, tag = 'scoped memory for tpu_custom_call.1']
    #allocation10 [shape = 'u8[8192]{0}', space=vmem, size = 0x2000, scoped, tag = 'input window, operand 4, single buffered']
    #allocation11 [shape = 'u8[65536]{0}', space=vmem, size = 0x10000, scoped, tag = 'input window, operand 5, single buffered']
    #allocation12 [shape = 's32[1]{0}', space=sflag, size = 0x4, scoped, tag = 'scoped memory for tpu_custom_call.1']
    #allocation13 [shape = 'u8[65536]{0}', space=vmem, size = 0x10000, scoped, tag = 'input window, operand 6, single buffered']
    #allocation14 [shape = 'u8[512]{0}', space=vmem, size = 0x400, scoped, tag = 'output window, operand 0, single buffered']
    %12 = vsyncpa [#allocation3], 0
    %13 = vsyncpa [#allocation6], 0
    %14 = vsyncpa [#allocation9], 0
    %15 = vsyncpa [#allocation12], 0
    %16 = vsyncpa [#allocation4], 0
    // Predicated region
    $region2: #{tpu_custom_call.1} parent=1 // pred_check
      _
    $region3: #{tpu_custom_call.1} parent=1 // pred_check_branch
      %18 = sbr.rel (0) target = $region5
    $region4: #{tpu_custom_call.1} parent=1 // pred_region
      %s20 = ssub.s32 256, 256
      %21 = vsyncadd [#allocation3], %s20
      %s22 = sshll.u32 [#allocation2], 4
      %s23 = int_to_ptr.vmem [resolvable:$true] %s22
      %28 = dma.hbm_to_vmem [thread:$0]  %s0, 256, %s23, [#allocation3], 128, 128, 8
    $region5: #{tpu_custom_call.1} parent=1 // pred_fallthru
      _
    // Predicated region
    $region6: #{tpu_custom_call.1} parent=1 // pred_check
      _
    $region7: #{tpu_custom_call.1} parent=1 // pred_check_branch
      %30 = sbr.rel (0) target = $region9
    $region8: #{tpu_custom_call.1} parent=1 // pred_region
      %s32 = ssub.s32 256, 256
      %33 = vsyncadd [#allocation6], %s32
      %s34 = sshll.u32 [#allocation5], 4
      %s35 = int_to_ptr.vmem [resolvable:$true] %s34
      %40 = dma.hbm_to_vmem [thread:$0]  %s1, 256, %s35, [#allocation6], 128, 128, 8
    $region9: #{tpu_custom_call.1} parent=1 // pred_fallthru
      _
    // Predicated region
    $region10: #{tpu_custom_call.1} parent=1 // pred_check
      _
    $region11: #{tpu_custom_call.1} parent=1 // pred_check_branch
      %42 = sbr.rel (0) target = $region13
    $region12: #{tpu_custom_call.1} parent=1 // pred_region
      %s44 = ssub.s32 256, 256
      %45 = vsyncadd [#allocation6], %s44
      %s46 = sshll.u32 [#allocation7], 4
      %s47 = int_to_ptr.vmem [resolvable:$true] %s46
      %52 = dma.hbm_to_vmem [thread:$0]  %s2, 256, %s47, [#allocation6], 128, 128, 8
    $region13: #{tpu_custom_call.1} parent=1 // pred_fallthru
      _
    // Predicated region
    $region14: #{tpu_custom_call.1} parent=1 // pred_check
      _
    $region15: #{tpu_custom_call.1} parent=1 // pred_check_branch
      %54 = sbr.rel (0) target = $region17
    $region16: #{tpu_custom_call.1} parent=1 // pred_region
      %s56 = ssub.s32 256, 256
      %57 = vsyncadd [#allocation9], %s56
      %s58 = sshll.u32 [#allocation8], 4
      %s59 = int_to_ptr.vmem [resolvable:$true] %s58
      %64 = dma.hbm_to_vmem [thread:$0]  %s3, 256, %s59, [#allocation9], 128, 128, 8
    $region17: #{tpu_custom_call.1} parent=1 // pred_fallthru
      _
    // Predicated region
    $region18: #{tpu_custom_call.1} parent=1 // pred_check
      _
    $region19: #{tpu_custom_call.1} parent=1 // pred_check_branch
      %66 = sbr.rel (0) target = $region21
    $region20: #{tpu_custom_call.1} parent=1 // pred_region
      %s68 = ssub.s32 256, 256
      %69 = vsyncadd [#allocation9], %s68
      %s70 = sshll.u32 [#allocation10], 4
      %s71 = int_to_ptr.vmem [resolvable:$true] %s70
      %76 = dma.hbm_to_vmem [thread:$0]  %s4, 256, %s71, [#allocation9], 128, 128, 8
    $region21: #{tpu_custom_call.1} parent=1 // pred_fallthru
      _
    // Predicated region
    $region22: #{tpu_custom_call.1} parent=1 // pred_check
      _
    $region23: #{tpu_custom_call.1} parent=1 // pred_check_branch
      %78 = sbr.rel (0) target = $region25
    $region24: #{tpu_custom_call.1} parent=1 // pred_region
      %s80 = ssub.s32 2048, 2048
      %81 = vsyncadd [#allocation12], %s80
      %s82 = sshll.u32 [#allocation11], 4
      %s83 = int_to_ptr.vmem [resolvable:$true] %s82
      %88 = dma.hbm_to_vmem [thread:$0]  %s5, 2048, %s83, [#allocation12], 128, 128, 8
    $region25: #{tpu_custom_call.1} parent=1 // pred_fallthru
      _
    // Predicated region
    $region26: #{tpu_custom_call.1} parent=1 // pred_check
      _
    $region27: #{tpu_custom_call.1} parent=1 // pred_check_branch
      %90 = sbr.rel (0) target = $region29
    $region28: #{tpu_custom_call.1} parent=1 // pred_region
      %s92 = ssub.s32 2048, 2048
      %93 = vsyncadd [#allocation12], %s92
      %s94 = sshll.u32 [#allocation13], 4
      %s95 = int_to_ptr.vmem [resolvable:$true] %s94
      %100 = dma.hbm_to_vmem [thread:$0]  %s6, 2048, %s95, [#allocation12], 128, 128, 8
    $region29: #{tpu_custom_call.1} parent=1 // pred_fallthru
      _
    // Predicated region
    $region30: #{tpu_custom_call.1} parent=1 // pred_check
      _
    $region31: #{tpu_custom_call.1} parent=1 // pred_check_branch
      %102 = sbr.rel (0) target = $region33
    $region32: #{tpu_custom_call.1} parent=1 // pred_region
      %103 = dma.done [#allocation3], 256
    $region33: #{tpu_custom_call.1} parent=1 // pred_fallthru
      _
    // Predicated region
    $region34: #{tpu_custom_call.1} parent=1 // pred_check
      _
    $region35: #{tpu_custom_call.1} parent=1 // pred_check_branch
      %105 = sbr.rel (0) target = $region37
    $region36: #{tpu_custom_call.1} parent=1 // pred_region
      %106 = dma.done [#allocation6], 256
    $region37: #{tpu_custom_call.1} parent=1 // pred_fallthru
      _
    // Predicated region
    $region38: #{tpu_custom_call.1} parent=1 // pred_check
      _
    $region39: #{tpu_custom_call.1} parent=1 // pred_check_branch
      %108 = sbr.rel (0) target = $region41
    $region40: #{tpu_custom_call.1} parent=1 // pred_region
      %109 = dma.done [#allocation6], 256
    $region41: #{tpu_custom_call.1} parent=1 // pred_fallthru
      _
    // Predicated region
    $region42: #{tpu_custom_call.1} parent=1 // pred_check
      _
    $region43: #{tpu_custom_call.1} parent=1 // pred_check_branch
      %111 = sbr.rel (0) target = $region45
    $region44: #{tpu_custom_call.1} parent=1 // pred_region
      %112 = dma.done [#allocation9], 256
    $region45: #{tpu_custom_call.1} parent=1 // pred_fallthru
      _
    // Predicated region
    $region46: #{tpu_custom_call.1} parent=1 // pred_check
      _
    $region47: #{tpu_custom_call.1} parent=1 // pred_check_branch
      %114 = sbr.rel (0) target = $region49
    $region48: #{tpu_custom_call.1} parent=1 // pred_region
      %115 = dma.done [#allocation9], 256
    $region49: #{tpu_custom_call.1} parent=1 // pred_fallthru
      _
    // Predicated region
    $region50: #{tpu_custom_call.1} parent=1 // pred_check
      _
    $region51: #{tpu_custom_call.1} parent=1 // pred_check_branch
      %117 = sbr.rel (0) target = $region53
    $region52: #{tpu_custom_call.1} parent=1 // pred_region
      %118 = dma.done [#allocation12], 2048
    $region53: #{tpu_custom_call.1} parent=1 // pred_fallthru
      _
    // Predicated region
    $region54: #{tpu_custom_call.1} parent=1 // pred_check
      _
    $region55: #{tpu_custom_call.1} parent=1 // pred_check_branch
      %120 = sbr.rel (0) target = $region57
    $region56: #{tpu_custom_call.1} parent=1 // pred_region
      %121 = dma.done [#allocation12], 2048
    $region57: #{tpu_custom_call.1} parent=1 // pred_fallthru
      _
    %v122 = vld [vmem:[#allocation2] sm:$0xff]
    %v123 = vld [vmem:[#allocation2 + $0x8] sm:$0xff]
    %v124 = vld [vmem:[#allocation5] sm:$0xff]
    %v125 = vld [vmem:[#allocation5 + $0x8] sm:$0xff]
    %v126 = vsub.f32 %v122, %v124
    %v127 = vsub.f32 %v123, %v125
    %v128 = vld [vmem:[#allocation11] sm:$0xff]
    %v129 = vld [vmem:[#allocation11 + $0x8] sm:$0xff]
    %v130 = vld [vmem:[#allocation11 + $0x10] sm:$0xff]
    %v131 = vld [vmem:[#allocation11 + $0x18] sm:$0xff]
    %v132 = vld [vmem:[#allocation11 + $0x20] sm:$0xff]
    %v133 = vld [vmem:[#allocation11 + $0x28] sm:$0xff]
    %v134 = vld [vmem:[#allocation11 + $0x30] sm:$0xff]
    %v135 = vld [vmem:[#allocation11 + $0x38] sm:$0xff]
    %v136 = vld [vmem:[#allocation11 + $0x40] sm:$0xff]
    %v137 = vld [vmem:[#allocation11 + $0x48] sm:$0xff]
    %v138 = vld [vmem:[#allocation11 + $0x50] sm:$0xff]
    %v139 = vld [vmem:[#allocation11 + $0x58] sm:$0xff]
    %v140 = vld [vmem:[#allocation11 + $0x60] sm:$0xff]
    %v141 = vld [vmem:[#allocation11 + $0x68] sm:$0xff]
    %v142 = vld [vmem:[#allocation11 + $0x70] sm:$0xff]
    %v143 = vld [vmem:[#allocation11 + $0x78] sm:$0xff]
    %144 = vmatprep.subr.mxu0 0.0
    %145 = vmatpush1.msra.mxu0 %v143
    %146 = vmatprep.subr.mxu0 0.0
    %147 = vmatpush1.msra.mxu0 %v142
    %148 = vmatprep.subr.mxu0 0.0
    %149 = vmatpush1.msra.mxu0 %v141
    %150 = vmatprep.subr.mxu0 0.0
    %151 = vmatpush1.msra.mxu0 %v140
    %152 = vmatprep.subr.mxu0 0.0
    %153 = vmatpush1.msra.mxu0 %v139
    %154 = vmatprep.subr.mxu0 0.0
    %155 = vmatpush1.msra.mxu0 %v138
    %156 = vmatprep.subr.mxu0 0.0
    %157 = vmatpush1.msra.mxu0 %v137
    %158 = vmatprep.subr.mxu0 0.0
    %159 = vmatpush1.msra.mxu0 %v136
    %160 = vmatprep.subr.mxu0 0.0
    %161 = vmatpush1.msra.mxu0 %v135
    %162 = vmatprep.subr.mxu0 0.0
    %163 = vmatpush1.msra.mxu0 %v134
    %164 = vmatprep.subr.mxu0 0.0
    %165 = vmatpush1.msra.mxu0 %v133
    %166 = vmatprep.subr.mxu0 0.0
    %167 = vmatpush1.msra.mxu0 %v132
    %168 = vmatprep.subr.mxu0 0.0
    %169 = vmatpush1.msra.mxu0 %v131
    %170 = vmatprep.subr.mxu0 0.0
    %171 = vmatpush1.msra.mxu0 %v130
    %172 = vmatprep.subr.mxu0 0.0
    %173 = vmatpush1.msra.mxu0 %v129
    %174 = vmatprep.subr.mxu0 0.0
    %175 = vmatpush1.msra.mxu0 %v128
    %176 = vmatprep.subr.mxu0 0.0
    %177 = vmatpush2.msra.mxu0 0.0
    %178 = vmatprep.subr.mxu0 0.0
    %179 = vmatpush2.msra.mxu0 0.0
    %180 = vmatprep.subr.mxu0 0.0
    %181 = vmatpush2.msra.mxu0 0.0
    %182 = vmatprep.subr.mxu0 0.0
    %183 = vmatpush2.msra.mxu0 0.0
    %184 = vmatprep.subr.mxu0 0.0
    %185 = vmatpush2.msra.mxu0 0.0
    %186 = vmatprep.subr.mxu0 0.0
    %187 = vmatpush2.msra.mxu0 0.0
    %188 = vmatprep.subr.mxu0 0.0
    %189 = vmatpush2.msra.mxu0 0.0
    %190 = vmatprep.subr.mxu0 0.0
    %191 = vmatpush2.msra.mxu0 0.0
    %192 = vmatprep.subr.mxu0 0.0
    %193 = vmatpush2.msra.mxu0 0.0
    %194 = vmatprep.subr.mxu0 0.0
    %195 = vmatpush2.msra.mxu0 0.0
    %196 = vmatprep.subr.mxu0 0.0
    %197 = vmatpush2.msra.mxu0 0.0
    %198 = vmatprep.subr.mxu0 0.0
    %199 = vmatpush2.msra.mxu0 0.0
    %200 = vmatprep.subr.mxu0 0.0
    %201 = vmatpush2.msra.mxu0 0.0
    %202 = vmatprep.subr.mxu0 0.0
    %203 = vmatpush2.msra.mxu0 0.0
    %204 = vmatprep.subr.mxu0 0.0
    %205 = vmatpush2.msra.mxu0 0.0
    %206 = vmatprep.subr.mxu0 0.0
    %207 = vmatpush2.msra.mxu0 0.0
    %208 = vmatprep.mubr.f32.mxu0 0.0
    %209 = vmatmul.mubr.f32.gmra.mxu0 %v126
    %v210 = vpop.f32.mrf.mxu0
    %v211 = vadd.f32 0.0, %v210
    %v212 = vpop.f32.mrf.mxu0
    %213 = vmatprep.mubr.f32.mxu0 0.0
    %214 = vmatmul.mubr.f32.gmra.mxu0 %v127
    %v215 = vpop.f32.mrf.mxu0
    %v216 = vadd.f32 0.0, %v215
    %v217 = vpop.f32.mrf.mxu0
    %218 = vdwg.mxu0
    %v219 = vld [vmem:[#allocation13] sm:$0xff]
    %v220 = vld [vmem:[#allocation13 + $0x8] sm:$0xff]
    %v221 = vld [vmem:[#allocation13 + $0x10] sm:$0xff]
    %v222 = vld [vmem:[#allocation13 + $0x18] sm:$0xff]
    %v223 = vld [vmem:[#allocation13 + $0x20] sm:$0xff]
    %v224 = vld [vmem:[#allocation13 + $0x28] sm:$0xff]
    %v225 = vld [vmem:[#allocation13 + $0x30] sm:$0xff]
    %v226 = vld [vmem:[#allocation13 + $0x38] sm:$0xff]
    %v227 = vld [vmem:[#allocation13 + $0x40] sm:$0xff]
    %v228 = vld [vmem:[#allocation13 + $0x48] sm:$0xff]
    %v229 = vld [vmem:[#allocation13 + $0x50] sm:$0xff]
    %v230 = vld [vmem:[#allocation13 + $0x58] sm:$0xff]
    %v231 = vld [vmem:[#allocation13 + $0x60] sm:$0xff]
    %v232 = vld [vmem:[#allocation13 + $0x68] sm:$0xff]
    %v233 = vld [vmem:[#allocation13 + $0x70] sm:$0xff]
    %v234 = vld [vmem:[#allocation13 + $0x78] sm:$0xff]
    %235 = vmatprep.subr.mxu0 0.0
    %236 = vmatpush1.msra.mxu0 %v234
    %237 = vmatprep.subr.mxu0 0.0
    %238 = vmatpush1.msra.mxu0 %v233
    %239 = vmatprep.subr.mxu0 0.0
    %240 = vmatpush1.msra.mxu0 %v232
    %241 = vmatprep.subr.mxu0 0.0
    %242 = vmatpush1.msra.mxu0 %v231
    %243 = vmatprep.subr.mxu0 0.0
    %244 = vmatpush1.msra.mxu0 %v230
    %245 = vmatprep.subr.mxu0 0.0
    %246 = vmatpush1.msra.mxu0 %v229
    %247 = vmatprep.subr.mxu0 0.0
    %248 = vmatpush1.msra.mxu0 %v228
    %249 = vmatprep.subr.mxu0 0.0
    %250 = vmatpush1.msra.mxu0 %v227
    %251 = vmatprep.subr.mxu0 0.0
    %252 = vmatpush1.msra.mxu0 %v226
    %253 = vmatprep.subr.mxu0 0.0
    %254 = vmatpush1.msra.mxu0 %v225
    %255 = vmatprep.subr.mxu0 0.0
    %256 = vmatpush1.msra.mxu0 %v224
    %257 = vmatprep.subr.mxu0 0.0
    %258 = vmatpush1.msra.mxu0 %v223
    %259 = vmatprep.subr.mxu0 0.0
    %260 = vmatpush1.msra.mxu0 %v222
    %261 = vmatprep.subr.mxu0 0.0
    %262 = vmatpush1.msra.mxu0 %v221
    %263 = vmatprep.subr.mxu0 0.0
    %264 = vmatpush1.msra.mxu0 %v220
    %265 = vmatprep.subr.mxu0 0.0
    %266 = vmatpush1.msra.mxu0 %v219
    %267 = vmatprep.subr.mxu0 0.0
    %268 = vmatpush2.msra.mxu0 0.0
    %269 = vmatprep.subr.mxu0 0.0
    %270 = vmatpush2.msra.mxu0 0.0
    %271 = vmatprep.subr.mxu0 0.0
    %272 = vmatpush2.msra.mxu0 0.0
    %273 = vmatprep.subr.mxu0 0.0
    %274 = vmatpush2.msra.mxu0 0.0
    %275 = vmatprep.subr.mxu0 0.0
    %276 = vmatpush2.msra.mxu0 0.0
    %277 = vmatprep.subr.mxu0 0.0
    %278 = vmatpush2.msra.mxu0 0.0
    %279 = vmatprep.subr.mxu0 0.0
    %280 = vmatpush2.msra.mxu0 0.0
    %281 = vmatprep.subr.mxu0 0.0
    %282 = vmatpush2.msra.mxu0 0.0
    %283 = vmatprep.subr.mxu0 0.0
    %284 = vmatpush2.msra.mxu0 0.0
    %285 = vmatprep.subr.mxu0 0.0
    %286 = vmatpush2.msra.mxu0 0.0
    %287 = vmatprep.subr.mxu0 0.0
    %288 = vmatpush2.msra.mxu0 0.0
    %289 = vmatprep.subr.mxu0 0.0
    %290 = vmatpush2.msra.mxu0 0.0
    %291 = vmatprep.subr.mxu0 0.0
    %292 = vmatpush2.msra.mxu0 0.0
    %293 = vmatprep.subr.mxu0 0.0
    %294 = vmatpush2.msra.mxu0 0.0
    %295 = vmatprep.subr.mxu0 0.0
    %296 = vmatpush2.msra.mxu0 0.0
    %297 = vmatprep.subr.mxu0 0.0
    %298 = vmatpush2.msra.mxu0 0.0
    %299 = vmatprep.mubr.f32.mxu0 0.0
    %300 = vmatmul.mubr.f32.gmra.mxu0 %v126
    %v301 = vpop.f32.mrf.mxu0
    %v302 = vadd.f32 0.0, %v301
    %v303 = vpop.f32.mrf.mxu0
    %304 = vmatprep.mubr.f32.mxu0 0.0
    %305 = vmatmul.mubr.f32.gmra.mxu0 %v127
    %v306 = vpop.f32.mrf.mxu0
    %v307 = vadd.f32 0.0, %v306
    %v308 = vpop.f32.mrf.mxu0
    %309 = vdwg.mxu0
    %v310 = vld [vmem:[#allocation7] sm:$0xff]
    %v311 = vld [vmem:[#allocation7 + $0x8] sm:$0xff]
    %vm312 = vcmask 130048
    %v314 = vsel %vm312, %v310, 0
    %v317 = vsel %vm312, %v311, 0
    %319 = vmatprep.subr.mxu0 0.0
    %320 = vmatpush1.msra.mxu0 0.0
    %321 = vmatprep.subr.mxu0 0.0
    %322 = vmatpush1.msra.mxu0 0.0
    %323 = vmatprep.subr.mxu0 0.0
    %324 = vmatpush1.msra.mxu0 0.0
    %325 = vmatprep.subr.mxu0 0.0
    %326 = vmatpush1.msra.mxu0 0.0
    %327 = vmatprep.subr.mxu0 0.0
    %328 = vmatpush1.msra.mxu0 0.0
    %329 = vmatprep.subr.mxu0 0.0
    %330 = vmatpush1.msra.mxu0 0.0
    %331 = vmatprep.subr.mxu0 0.0
    %332 = vmatpush1.msra.mxu0 0.0
    %333 = vmatprep.subr.mxu0 0.0
    %334 = vmatpush1.msra.mxu0 0.0
    %335 = vmatprep.subr.mxu0 0.0
    %336 = vmatpush1.msra.mxu0 0.0
    %337 = vmatprep.subr.mxu0 0.0
    %338 = vmatpush1.msra.mxu0 0.0
    %339 = vmatprep.subr.mxu0 0.0
    %340 = vmatpush1.msra.mxu0 0.0
    %341 = vmatprep.subr.mxu0 0.0
    %342 = vmatpush1.msra.mxu0 0.0
    %343 = vmatprep.subr.mxu0 0.0
    %344 = vmatpush1.msra.mxu0 0.0
    %345 = vmatprep.subr.mxu0 0.0
    %346 = vmatpush1.msra.mxu0 0.0
    %347 = vmatprep.subr.mxu0 0.0
    %348 = vmatpush1.msra.mxu0 %v216
    %349 = vmatprep.subr.mxu0 0.0
    %350 = vmatpush1.msra.mxu0 %v211
    %351 = vmatprep.subr.mxu0 0.0
    %352 = vmatpush2.msra.mxu0 0.0
    %353 = vmatprep.subr.mxu0 0.0
    %354 = vmatpush2.msra.mxu0 0.0
    %355 = vmatprep.subr.mxu0 0.0
    %356 = vmatpush2.msra.mxu0 0.0
    %357 = vmatprep.subr.mxu0 0.0
    %358 = vmatpush2.msra.mxu0 0.0
    %359 = vmatprep.subr.mxu0 0.0
    %360 = vmatpush2.msra.mxu0 0.0
    %361 = vmatprep.subr.mxu0 0.0
    %362 = vmatpush2.msra.mxu0 0.0
    %363 = vmatprep.subr.mxu0 0.0
    %364 = vmatpush2.msra.mxu0 0.0
    %365 = vmatprep.subr.mxu0 0.0
    %366 = vmatpush2.msra.mxu0 0.0
    %367 = vmatprep.subr.mxu0 0.0
    %368 = vmatpush2.msra.mxu0 0.0
    %369 = vmatprep.subr.mxu0 0.0
    %370 = vmatpush2.msra.mxu0 0.0
    %371 = vmatprep.subr.mxu0 0.0
    %372 = vmatpush2.msra.mxu0 0.0
    %373 = vmatprep.subr.mxu0 0.0
    %374 = vmatpush2.msra.mxu0 0.0
    %375 = vmatprep.subr.mxu0 0.0
    %376 = vmatpush2.msra.mxu0 0.0
    %377 = vmatprep.subr.mxu0 0.0
    %378 = vmatpush2.msra.mxu0 0.0
    %379 = vmatprep.subr.mxu0 0.0
    %380 = vmatpush2.msra.mxu0 0.0
    %381 = vmatprep.subr.mxu0 0.0
    %382 = vmatpush2.msra.mxu0 0.0
    %383 = vmatprep.mubr.f32.mxu0 0.0
    %384 = vmatmul.mubr.f32.gmra.mxu0 %v314
    %v385 = vpop.f32.mrf.mxu0
    %v386 = vadd.f32 0.0, %v385
    %v387 = vpop.f32.mrf.mxu0
    %388 = vmatprep.mubr.f32.mxu0 0.0
    %389 = vmatmul.mubr.f32.gmra.mxu0 %v317
    %v390 = vpop.f32.mrf.mxu0
    %v391 = vadd.f32 0.0, %v390
    %v392 = vpop.f32.mrf.mxu0
    %393 = vdwg.mxu0
    %v394 = vld [vmem:[#allocation8] sm:$0xff]
    %v395 = vld [vmem:[#allocation8 + $0x8] sm:$0xff]
    %v397 = vsel %vm312, %v394, 0
    %v400 = vsel %vm312, %v395, 0
    %402 = vmatprep.subr.mxu0 0.0
    %403 = vmatpush1.msra.mxu0 0.0
    %404 = vmatprep.subr.mxu0 0.0
    %405 = vmatpush1.msra.mxu0 0.0
    %406 = vmatprep.subr.mxu0 0.0
    %407 = vmatpush1.msra.mxu0 0.0
    %408 = vmatprep.subr.mxu0 0.0
    %409 = vmatpush1.msra.mxu0 0.0
    %410 = vmatprep.subr.mxu0 0.0
    %411 = vmatpush1.msra.mxu0 0.0
    %412 = vmatprep.subr.mxu0 0.0
    %413 = vmatpush1.msra.mxu0 0.0
    %414 = vmatprep.subr.mxu0 0.0
    %415 = vmatpush1.msra.mxu0 0.0
    %416 = vmatprep.subr.mxu0 0.0
    %417 = vmatpush1.msra.mxu0 0.0
    %418 = vmatprep.subr.mxu0 0.0
    %419 = vmatpush1.msra.mxu0 0.0
    %420 = vmatprep.subr.mxu0 0.0
    %421 = vmatpush1.msra.mxu0 0.0
    %422 = vmatprep.subr.mxu0 0.0
    %423 = vmatpush1.msra.mxu0 0.0
    %424 = vmatprep.subr.mxu0 0.0
    %425 = vmatpush1.msra.mxu0 0.0
    %426 = vmatprep.subr.mxu0 0.0
    %427 = vmatpush1.msra.mxu0 0.0
    %428 = vmatprep.subr.mxu0 0.0
    %429 = vmatpush1.msra.mxu0 0.0
    %430 = vmatprep.subr.mxu0 0.0
    %431 = vmatpush1.msra.mxu0 %v307
    %432 = vmatprep.subr.mxu0 0.0
    %433 = vmatpush1.msra.mxu0 %v302
    %434 = vmatprep.subr.mxu0 0.0
    %435 = vmatpush2.msra.mxu0 0.0
    %436 = vmatprep.subr.mxu0 0.0
    %437 = vmatpush2.msra.mxu0 0.0
    %438 = vmatprep.subr.mxu0 0.0
    %439 = vmatpush2.msra.mxu0 0.0
    %440 = vmatprep.subr.mxu0 0.0
    %441 = vmatpush2.msra.mxu0 0.0
    %442 = vmatprep.subr.mxu0 0.0
    %443 = vmatpush2.msra.mxu0 0.0
    %444 = vmatprep.subr.mxu0 0.0
    %445 = vmatpush2.msra.mxu0 0.0
    %446 = vmatprep.subr.mxu0 0.0
    %447 = vmatpush2.msra.mxu0 0.0
    %448 = vmatprep.subr.mxu0 0.0
    %449 = vmatpush2.msra.mxu0 0.0
    %450 = vmatprep.subr.mxu0 0.0
    %451 = vmatpush2.msra.mxu0 0.0
    %452 = vmatprep.subr.mxu0 0.0
    %453 = vmatpush2.msra.mxu0 0.0
    %454 = vmatprep.subr.mxu0 0.0
    %455 = vmatpush2.msra.mxu0 0.0
    %456 = vmatprep.subr.mxu0 0.0
    %457 = vmatpush2.msra.mxu0 0.0
    %458 = vmatprep.subr.mxu0 0.0
    %459 = vmatpush2.msra.mxu0 0.0
    %460 = vmatprep.subr.mxu0 0.0
    %461 = vmatpush2.msra.mxu0 0.0
    %462 = vmatprep.subr.mxu0 0.0
    %463 = vmatpush2.msra.mxu0 0.0
    %464 = vmatprep.subr.mxu0 0.0
    %465 = vmatpush2.msra.mxu0 0.0
    %466 = vmatprep.mubr.f32.mxu0 0.0
    %467 = vmatmul.mubr.f32.gmra.mxu0 %v397
    %v468 = vpop.f32.mrf.mxu0
    %v469 = vadd.f32 0.0, %v468
    %v470 = vpop.f32.mrf.mxu0
    %471 = vmatprep.mubr.f32.mxu0 0.0
    %472 = vmatmul.mubr.f32.gmra.mxu0 %v400
    %v473 = vpop.f32.mrf.mxu0
    %v474 = vadd.f32 0.0, %v473
    %v475 = vpop.f32.mrf.mxu0
    %476 = vdwg.mxu0
    %v477 = vld [vmem:[#allocation10] sm:$0xff]
    %v478 = vld [vmem:[#allocation10 + $0x8] sm:$0xff]
    %v479 = vadd.f32 %v211, %v302
    %v480 = vadd.f32 %v216, %v307
    %v482 = vsel %vm312, %v477, 0
    %v485 = vsel %vm312, %v478, 0
    %487 = vmatprep.subr.mxu0 0.0
    %488 = vmatpush1.msra.mxu0 0.0
    %489 = vmatprep.subr.mxu0 0.0
    %490 = vmatpush1.msra.mxu0 0.0
    %491 = vmatprep.subr.mxu0 0.0
    %492 = vmatpush1.msra.mxu0 0.0
    %493 = vmatprep.subr.mxu0 0.0
    %494 = vmatpush1.msra.mxu0 0.0
    %495 = vmatprep.subr.mxu0 0.0
    %496 = vmatpush1.msra.mxu0 0.0
    %497 = vmatprep.subr.mxu0 0.0
    %498 = vmatpush1.msra.mxu0 0.0
    %499 = vmatprep.subr.mxu0 0.0
    %500 = vmatpush1.msra.mxu0 0.0
    %501 = vmatprep.subr.mxu0 0.0
    %502 = vmatpush1.msra.mxu0 0.0
    %503 = vmatprep.subr.mxu0 0.0
    %504 = vmatpush1.msra.mxu0 0.0
    %505 = vmatprep.subr.mxu0 0.0
    %506 = vmatpush1.msra.mxu0 0.0
    %507 = vmatprep.subr.mxu0 0.0
    %508 = vmatpush1.msra.mxu0 0.0
    %509 = vmatprep.subr.mxu0 0.0
    %510 = vmatpush1.msra.mxu0 0.0
    %511 = vmatprep.subr.mxu0 0.0
    %512 = vmatpush1.msra.mxu0 0.0
    %513 = vmatprep.subr.mxu0 0.0
    %514 = vmatpush1.msra.mxu0 0.0
    %515 = vmatprep.subr.mxu0 0.0
    %516 = vmatpush1.msra.mxu0 %v480
    %517 = vmatprep.subr.mxu0 0.0
    %518 = vmatpush1.msra.mxu0 %v479
    %519 = vmatprep.subr.mxu0 0.0
    %520 = vmatpush2.msra.mxu0 0.0
    %521 = vmatprep.subr.mxu0 0.0
    %522 = vmatpush2.msra.mxu0 0.0
    %523 = vmatprep.subr.mxu0 0.0
    %524 = vmatpush2.msra.mxu0 0.0
    %525 = vmatprep.subr.mxu0 0.0
    %526 = vmatpush2.msra.mxu0 0.0
    %527 = vmatprep.subr.mxu0 0.0
    %528 = vmatpush2.msra.mxu0 0.0
    %529 = vmatprep.subr.mxu0 0.0
    %530 = vmatpush2.msra.mxu0 0.0
    %531 = vmatprep.subr.mxu0 0.0
    %532 = vmatpush2.msra.mxu0 0.0
    %533 = vmatprep.subr.mxu0 0.0
    %534 = vmatpush2.msra.mxu0 0.0
    %535 = vmatprep.subr.mxu0 0.0
    %536 = vmatpush2.msra.mxu0 0.0
    %537 = vmatprep.subr.mxu0 0.0
    %538 = vmatpush2.msra.mxu0 0.0
    %539 = vmatprep.subr.mxu0 0.0
    %540 = vmatpush2.msra.mxu0 0.0
    %541 = vmatprep.subr.mxu0 0.0
    %542 = vmatpush2.msra.mxu0 0.0
    %543 = vmatprep.subr.mxu0 0.0
    %544 = vmatpush2.msra.mxu0 0.0
    %545 = vmatprep.subr.mxu0 0.0
    %546 = vmatpush2.msra.mxu0 0.0
    %547 = vmatprep.subr.mxu0 0.0
    %548 = vmatpush2.msra.mxu0 0.0
    %549 = vmatprep.subr.mxu0 0.0
    %550 = vmatpush2.msra.mxu0 0.0
    %551 = vmatprep.mubr.f32.mxu0 0.0
    %552 = vmatmul.mubr.f32.gmra.mxu0 %v482
    %v553 = vpop.f32.mrf.mxu0
    %v554 = vadd.f32 0.0, %v553
    %v555 = vpop.f32.mrf.mxu0
    %556 = vmatprep.mubr.f32.mxu0 0.0
    %557 = vmatmul.mubr.f32.gmra.mxu0 %v485
    %v558 = vpop.f32.mrf.mxu0
    %v559 = vadd.f32 0.0, %v558
    %v560 = vpop.f32.mrf.mxu0
    %561 = vdwg.mxu0
    %v562 = vsub.f32 %v386, %v469
    %v563 = vsub.f32 %v391, %v474
    %v564 = vadd.f32 %v386, %v469
    %v565 = vadd.f32 %v391, %v474
    %v566 = vsub.f32 %v564, %v554
    %v567 = vsub.f32 %v565, %v559
    %v568 = vmul.f32 %v562, %v562
    %v569 = vmul.f32 %v563, %v563
    %v570 = vmul.f32 %v566, %v566
    %v571 = vmul.f32 %v567, %v567
    %v572 = vadd.f32 %v568, %v570
    %v573 = vadd.f32 %v569, %v571
    %v574 = vrsqrt.pop %v572
    %v575 = vmul.f32 %v572, %v574
    %vm576 = vcmp.eq.f32.partialorder %v572, inf
    %v577 = vsel %vm576, %v572, %v575
    %vm578 = vcmp.eq.f32.partialorder %v572, 0.0
    %v579 = vand.u32 %v572, 2147483648
    %v580 = vsel %vm578, %v579, %v577
    %v581 = vrsqrt.pop %v573
    %v582 = vmul.f32 %v573, %v581
    %vm583 = vcmp.eq.f32.partialorder %v573, inf
    %v584 = vsel %vm583, %v573, %v582
    %vm585 = vcmp.eq.f32.partialorder %v573, 0.0
    %v586 = vand.u32 %v573, 2147483648
    %v587 = vsel %vm585, %v586, %v584
    %v588 = vmax.f32 %v580, %v587
    %v589 = vrot.slane %v588, 4
    %v590 = vmax.f32 %v588, %v589
    %v591 = vrot.slane %v590, 2
    %v592 = vmax.f32 %v590, %v591
    %v593 = vrot.slane %v592, 1
    %v594 = vmax.f32 %v592, %v593
    %596 = vrot.lane.b32.xlu0 %v594, 112
    %v597 = vpop.permute.xlu0 %596
    %599 = vrot.lane.b32.xlu0 %v594, 96
    %v600 = vpop.permute.xlu0 %599
    %602 = vrot.lane.b32.xlu0 %v594, 80
    %v603 = vpop.permute.xlu0 %602
    %605 = vrot.lane.b32.xlu0 %v594, 64
    %v606 = vpop.permute.xlu0 %605
    %608 = vrot.lane.b32.xlu0 %v594, 48
    %v609 = vpop.permute.xlu0 %608
    %611 = vrot.lane.b32.xlu0 %v594, 32
    %v612 = vpop.permute.xlu0 %611
    %614 = vrot.lane.b32.xlu0 %v594, 16
    %v615 = vpop.permute.xlu0 %614
    %v617 = vcombine.low %v594, %v600
    %v619 = vunpack.c.l.s4 1983009808
    %v620 = vunpack.c.0.s8 %v619
    %v621 = vlaneseq
    %v622 = vshrl.u32 %v621, 7
    %v623 = vsub.s32 %v620, %v622
    %v624 = vrot.slane %v617, %v623
    %v625 = vcombine.low %v597, %v603
    %v627 = vunpack.c.l.s4 1983009808
    %v628 = vunpack.c.0.s8 %v627
    %v629 = vlaneseq
    %v630 = vshrl.u32 %v629, 7
    %v631 = vsub.s32 %v628, %v630
    %v632 = vrot.slane %v625, %v631
    %v633 = vcombine.low %v606, %v612
    %v635 = vunpack.c.l.s4 1983009808
    %v636 = vunpack.c.0.s8 %v635
    %v637 = vlaneseq
    %v638 = vshrl.u32 %v637, 7
    %v639 = vsub.s32 %v636, %v638
    %v640 = vrot.slane %v633, %v639
    %v641 = vcombine.low %v609, %v615
    %v643 = vunpack.c.l.s4 1983009808
    %v644 = vunpack.c.0.s8 %v643
    %v645 = vlaneseq
    %v646 = vshrl.u32 %v645, 7
    %v647 = vsub.s32 %v644, %v646
    %v648 = vrot.slane %v641, %v647
    %v649 = vcombine.low %v624, %v632
    %v651 = vunpack.c.l.s4 1934713408
    %v652 = vunpack.c.0.s8 %v651
    %v653 = vlaneseq
    %v654 = vshrl.u32 %v653, 7
    %v655 = vsub.s32 %v652, %v654
    %v656 = vrot.slane %v649, %v655
    %v657 = vcombine.low %v640, %v648
    %v659 = vunpack.c.l.s4 1934713408
    %v660 = vunpack.c.0.s8 %v659
    %v661 = vlaneseq
    %v662 = vshrl.u32 %v661, 7
    %v663 = vsub.s32 %v660, %v662
    %v664 = vrot.slane %v657, %v663
    %v665 = vcombine.low %v656, %v664
    %v666 = vsel %vm312, %v665, -inf
    %667 = vmax.xlane.f32.xlu0 %v666
    %v668 = vpop.xlane.xlu0 %667
    %v669 = vcombine.high %v668, 0.0
    %v671 = vunpack.c.l.s4 1983009808
    %v672 = vunpack.c.0.s8 %v671
    %v673 = vlaneseq
    %v674 = vshrl.u32 %v673, 7
    %v675 = vsub.s32 %v672, %v674
    %v676 = vrot.slane %v668, %v675
    %v678 = vunpack.c.l.s4 1983009808
    %v679 = vunpack.c.0.s8 %v678
    %v680 = vlaneseq
    %v681 = vshrl.u32 %v680, 7
    %v682 = vsub.s32 %v679, %v681
    %v683 = vrot.slane %v669, %v682
    %v684 = vcombine.high %v676, 0.0
    %v686 = vunpack.c.l.s4 1934713408
    %v687 = vunpack.c.0.s8 %v686
    %v688 = vlaneseq
    %v689 = vshrl.u32 %v688, 7
    %v690 = vsub.s32 %v687, %v689
    %v691 = vrot.slane %v676, %v690
    %v693 = vunpack.c.l.s4 1934713408
    %v694 = vunpack.c.0.s8 %v693
    %v695 = vlaneseq
    %v696 = vshrl.u32 %v695, 7
    %v697 = vsub.s32 %v694, %v696
    %v698 = vrot.slane %v684, %v697
    %v699 = vcombine.high %v683, 0.0
    %v701 = vunpack.c.l.s4 1934713408
    %v702 = vunpack.c.0.s8 %v701
    %v703 = vlaneseq
    %v704 = vshrl.u32 %v703, 7
    %v705 = vsub.s32 %v702, %v704
    %v706 = vrot.slane %v683, %v705
    %v708 = vunpack.c.l.s4 1934713408
    %v709 = vunpack.c.0.s8 %v708
    %v710 = vlaneseq
    %v711 = vshrl.u32 %v710, 7
    %v712 = vsub.s32 %v709, %v711
    %v713 = vrot.slane %v699, %v712
    %v714 = vcombine.high %v691, 0.0
    %v715 = vcombine.high %v698, 0.0
    %v716 = vcombine.high %v706, 0.0
    %v717 = vcombine.high %v713, 0.0
    %719 = vrot.lane.b32.xlu0 %v714, 16
    %v720 = vpop.permute.xlu0 %719
    %723 = vrot.lane.b32.xlu0 %v698, 32
    %v724 = vpop.permute.xlu0 %723
    %727 = vrot.lane.b32.xlu0 %v715, 48
    %v728 = vpop.permute.xlu0 %727
    %731 = vrot.lane.b32.xlu0 %v706, 64
    %v732 = vpop.permute.xlu0 %731
    %735 = vrot.lane.b32.xlu0 %v716, 80
    %v736 = vpop.permute.xlu0 %735
    %739 = vrot.lane.b32.xlu0 %v713, 96
    %v740 = vpop.permute.xlu0 %739
    %743 = vrot.lane.b32.xlu0 %v717, 112
    %v744 = vpop.permute.xlu0 %743
    %v746 = vsel %vm312, %v691, %v720
    %vm747 = vcmask 261120
    %v748 = vsel %vm747, %v746, %v724
    %vm749 = vcmask 392192
    %v750 = vsel %vm749, %v748, %v728
    %vm751 = vcmask 523264
    %v752 = vsel %vm751, %v750, %v732
    %vm753 = vcmask 654336
    %v754 = vsel %vm753, %v752, %v736
    %vm755 = vcmask 785408
    %v756 = vsel %vm755, %v754, %v740
    %vm757 = vcmask 916480
    %v758 = vsel %vm757, %v756, %v744
    %vm759 = vcmp.gt.f32.partialorder %v758, 0.0
    %v760 = vrcp.pop %v758
    %v761 = vmul.f32 1.0, %v760
    %v762 = vsel %vm759, %v761, 0.0
    %v763 = vlaneseq
    %v764 = vshrl.u32 %v763, 7
    %v765 = vsub.s32 0, %v764
    %v766 = vrot.slane %v762, %v765
    %v767 = vmul.f32 %v580, %v766
    %v768 = vmul.f32 %v587, %v766
    %v769 = vmax.f32 %v767, 0.0
    %v770 = vmax.f32 %v768, 0.0
    %v771 = vmin.f32 %v769, 1.0
    %v772 = vmin.f32 %v770, 1.0
    %v773 = vmul.f32 %v771, %v572
    %v774 = vmul.f32 %v772, %v573
    %v775 = vadd.f32 %v773, %v774
    %v776 = vrot.slane %v775, 4
    %v777 = vadd.f32 %v775, %v776
    %v778 = vrot.slane %v777, 2
    %v779 = vadd.f32 %v777, %v778
    %v780 = vrot.slane %v779, 1
    %v781 = vadd.f32 %v779, %v780
    %v782 = vadd.f32 %v781, 0.0
    %783 = vst [vmem:[#allocation14] sm:$0x1] %v782
    // Predicated region
    $region58: #{tpu_custom_call.1} parent=1 // pred_check
      _
    $region59: #{tpu_custom_call.1} parent=1 // pred_check_branch
      %785 = sbr.rel (0) target = $region61
    $region60: #{tpu_custom_call.1} parent=1 // pred_region
      %s787 = ssub.s32 16, 16
      %788 = vsyncadd [#allocation4], %s787
      %s790 = sshll.u32 [#allocation14], 4
      %s791 = int_to_ptr.vmem [resolvable:$true] %s790
      %793 = dma.vmem_to_hbm [thread:$0]  %s791, 16, %s7, [#allocation4]
    $region61: #{tpu_custom_call.1} parent=1 // pred_fallthru
      _
    // Predicated region
    $region62: #{tpu_custom_call.1} parent=1 // pred_check
      _
    $region63: #{tpu_custom_call.1} parent=1 // pred_check_branch
      %795 = sbr.rel (0) target = $region65
    $region64: #{tpu_custom_call.1} parent=1 // pred_region
      %796 = dma.done [#allocation4], 16
    $region65: #{tpu_custom_call.1} parent=1 // pred_fallthru
      _
    %797 = vsyncpa [#allocation3], 1
    %798 = vsyncpa [#allocation6], 1
    %799 = vsyncpa [#allocation9], 1
    %800 = vsyncpa [#allocation12], 1
    %801 = vsyncpa [#allocation4], 1

</llo_original>
